<compile_context>
chip_gen: v7x
topology: tpu7x:2x2x1
jax: 0.10.0
libtpu: 0.0.40
codegen_flags: <defaults>
</compile_context>

<pallas_src>
import math

import jax
import jax.numpy as jnp
from jax.experimental import pallas as pl
from jax.experimental.pallas import tpu as pltpu

_MAX_LANE = 4096              # largest lane-dim tile (multiple of 128)
_MIN_PALLAS_ELEMS = 1 << 16   # below this, standalone-kernel overhead dominates


def _pixel_preprocess_kernel(x_ref, o_ref):
    # Purely elementwise: convert + one vmul + one vsub per vreg, fully hidden
    # under the HBM bound.  Multiply by the hoisted reciprocal instead of an
    # f32 divide (divide by a non-power-of-two lowers to a long-latency
    # reciprocal sequence); differs from x.div(255.) by <= 1 ulp.
    x = x_ref[...].astype(jnp.float32)
    y = x * jnp.float32(1.0 / 255.0) - jnp.float32(0.5)
    o_ref[...] = y.astype(o_ref.dtype)


def _cdiv(a, b):
    return -(-a // b)


def _round_up(a, m):
    return -(-a // m) * m


def _pick_lane(n):
    """Largest multiple-of-128 divisor of n that is <= _MAX_LANE (None if n%128)."""
    if n % 128 != 0:
        return None
    m = n // 128
    best = 1
    for d in range(2, min(m, _MAX_LANE // 128) + 1):
        if m % d == 0:
            best = d
    return 128 * best


def _vmem_budget_bytes():
    """Per-step VMEM budget (double-buffered input + output)."""
    try:
        kind = jax.devices()[0].device_kind.lower()
    except Exception:
        kind = ""
    if "v6" in kind or "v7" in kind:
        # v6e: 32 MiB scoped default / 128 MiB physical.
        # v7x: 32 MiB scoped default / 64 MiB physical -- stay well inside it.
        return 28 << 20
    # v5e (and unknown generations): 16 MiB scoped default -> stay conservative.
    return 12 << 20


def pixel_preprocess(x, *, out_dtype=jnp.float32, force_pallas=False):
    """Normalizes pixel observations to [-0.5, 0.5] (PixelPreprocess.forward).

    Accepts any real dtype (uint8 pixels, bf16, f32, ...).  Returns
    `out_dtype` (float32 by default, matching the PyTorch contract; bfloat16
    is offered for bf16 consumers -- it cuts output HBM traffic ~40%).

    The standalone Pallas kernel only pays off for sub-4-byte inputs (the
    1-byte uint8 ingest is the win); f32 inputs, tiny inputs, and sizes not
    divisible by 128 use plain jnp so XLA can fuse the normalize into the
    consumer.
    """
    orig_shape = x.shape
    n = math.prod(orig_shape) if orig_shape else 1
    out_dtype = jnp.dtype(out_dtype)
    in_itemsize = jnp.dtype(x.dtype).itemsize

    lane = _pick_lane(n)
    worth_it = n >= _MIN_PALLAS_ELEMS and in_itemsize < 4
    if n == 0 or lane is None or not (worth_it or force_pallas):
        y = x.astype(jnp.float32) * jnp.float32(1.0 / 255.0) - jnp.float32(0.5)
        return y.astype(out_dtype)

    # Flatten to a lane-dense (rows, lane) slab.  lane divides n exactly, so
    # there is no jnp.pad / trailing slice (each would be a full extra HBM
    # pass); raggedness only ever appears on the row axis, where Pallas masks
    # the last block's OOB writes.  Safe because the op is purely elementwise
    # (no cross-element reduction may be added without re-masking).
    rows = n // lane
    x2d = x.reshape(rows, lane)

    # Generation-aware tile sizing: biggest row tile whose double-buffered
    # in+out footprint fits the scoped-VMEM budget.
    bytes_per_row = lane * (in_itemsize + out_dtype.itemsize)
    tile_max = max(32, (_vmem_budget_bytes() // (2 * bytes_per_row)) // 32 * 32)

    if rows < 32:
        tile_rows = rows          # full-extent single block: always layout-legal
        steps = 1
    else:
        # Multiple of 32 (uint8 sublane packing) and <= rows.
        tile_rows = min(tile_max, (rows // 32) * 32)
        steps = _cdiv(rows, tile_rows)
        # Never run a 1-step grid when avoidable: >=4 steps enables
        # prefetch/writeback overlap and lets v7x's two TensorCores stream.
        if steps < 4:
            tile_rows = min(tile_rows, max(32, _round_up(_cdiv(rows, 4), 32)))
            steps = _cdiv(rows, tile_rows)
        # Best-effort even step count so the "parallel" axis load-balances
        # across v7x's two cores (harmless on single-TC v5e/v6e).
        if steps > 1 and steps % 2 == 1:
            for cand in range(tile_rows - 32, 31, -32):
                s = _cdiv(rows, cand)
                if s % 2 == 0:
                    tile_rows, steps = cand, s
                    break
                if s > steps + 4:   # don't fragment into tiny tiles
                    break

    out2d = pl.pallas_call(
        _pixel_preprocess_kernel,
        out_shape=jax.ShapeDtypeStruct((rows, lane), out_dtype),
        grid_spec=pl.GridSpec(
            grid=(steps,),
            in_specs=[pl.BlockSpec((tile_rows, lane), lambda i: (i, 0))],
            out_specs=pl.BlockSpec((tile_rows, lane), lambda i: (i, 0)),
        ),
        compiler_params=pltpu.CompilerParams(
            # One independent axis; "parallel" lets v7x shard grid steps across
            # both TensorCores (harmless on single-TC v5e/v6e).
            dimension_semantics=("parallel",),
        ),
    )(x2d)

    return out2d.reshape(orig_shape)


if __name__ == "__main__":
    key = jax.random.PRNGKey(0)
    k0, k1 = jax.random.split(key)

    # Pixel observations: batch=2, channels=4, spatial=16x16, values in [0, 255].
    x = jax.random.uniform(k0, (2, 4, 16, 16), dtype=jnp.float32,
                           minval=0.0, maxval=255.0)

    # Force the Pallas path even though this input is tiny / f32, so the
    # kernel is actually exercised (default dispatch would use fused jnp).
    out = jax.block_until_ready(pixel_preprocess(x, force_pallas=True))
    ref = x / 255.0 - 0.5
    assert out.shape == x.shape
    assert out.dtype == jnp.float32
    assert jnp.max(jnp.abs(out - ref)) < 1e-6

    # uint8 ingest path (1 byte/elem in, 4 bytes/elem out).
    x_u8 = jnp.round(x).astype(jnp.uint8)
    out_u8 = jax.block_until_ready(pixel_preprocess(x_u8, force_pallas=True))
    ref_u8 = x_u8.astype(jnp.float32) / 255.0 - 0.5
    assert out_u8.shape == x.shape
    assert out_u8.dtype == jnp.float32
    assert jnp.max(jnp.abs(out_u8 - ref_u8)) < 1e-6

    # Medium uint8 input: takes the Pallas path naturally and exercises the
    # multi-step (pipelined) grid with a ragged-free lane-dense layout.
    x_big = jax.random.randint(k1, (64, 3, 64, 64), 0, 256,
                               dtype=jnp.int32).astype(jnp.uint8)
    out_big = jax.block_until_ready(pixel_preprocess(x_big))
    ref_big = x_big.astype(jnp.float32) / 255.0 - 0.5
    assert out_big.shape == x_big.shape
    assert out_big.dtype == jnp.float32
    assert jnp.max(jnp.abs(out_big - ref_big)) < 1e-6

    print("KERNEL_OK")
</pallas_src>

<mosaic_0001>
module attributes {stable_mosaic.version = 11 : i64} {
  func.func @_pixel_preprocess_kernel(%arg0: i32, %arg1: memref<1x2048xf32, #tpu.memory_space<vmem>>, %arg2: memref<1x2048xf32, #tpu.memory_space<vmem>>) attributes {dimension_semantics = [#tpu.dimension_semantics<parallel>], iteration_bounds = array<i64: 1>, scalar_prefetch = 0 : i64, scratch_operands = 0 : i64, tpu.core_type = #tpu.core_type<tc>, window_params = [{transform_indices = @transform_0, window_bounds = array<i64: 1, 2048>}, {transform_indices = @transform_1, window_bounds = array<i64: 1, 2048>}]} {
    %c0 = arith.constant 0 : index
    %c0_0 = arith.constant 0 : index
    %0 = vector.load %arg1[%c0, %c0_0] : memref<1x2048xf32, #tpu.memory_space<vmem>>, vector<1x2048xf32>
    %cst = arith.constant 0.00392156886 : f32
    %1 = vector.broadcast %cst : f32 to vector<1x2048xf32>
    %2 = arith.mulf %0, %1 : vector<1x2048xf32>
    %cst_1 = arith.constant 5.000000e-01 : f32
    %3 = vector.broadcast %cst_1 : f32 to vector<1x2048xf32>
    %4 = arith.subf %2, %3 : vector<1x2048xf32>
    %c0_2 = arith.constant 0 : index
    %c0_3 = arith.constant 0 : index
    %5 = vector.load %arg2[%c0_2, %c0_3] : memref<1x2048xf32, #tpu.memory_space<vmem>>, vector<1x2048xf32>
    tpu.vector_store %arg2[%c0_2, %c0_3], %4 {strides = array<i32>} : memref<1x2048xf32, #tpu.memory_space<vmem>>, vector<1x2048xf32>,
    return
  }
  func.func @transform_0(%arg0: i32) -> (i32, i32) {
    %c0_i32 = arith.constant 0 : i32
    %c0_i32_0 = arith.constant 0 : i32
    return %arg0, %c0_i32 : i32, i32
  }
  func.func @transform_1(%arg0: i32) -> (i32, i32) {
    %c0_i32 = arith.constant 0 : i32
    %c0_i32_0 = arith.constant 0 : i32
    return %arg0, %c0_i32 : i32, i32
  }
}

</mosaic_0001>

<llo_original>
// kernel: tpu_custom_call.1
$region0: #{tpu_custom_call.1}
  #allocation0 [shape = 'u32[]', space=smem, size = 0x4, offset = 0x4, fixed_abs, tag = 'smem constant byte address 0x4 - core index']
  #allocation1 [shape = 'u32[144,128]{1,0:T(1,128)}', space=vmem, size = 0x12000, scoped, tag = 'internal scratch']
  %s0 = inlined_call_operand.hbm [shape: f32[1,2048], index: 0, kind: input, shape index: {}]
  %s1 = inlined_call_operand.hbm [shape: f32[1,2048], index: 1, kind: output, shape index: {}]
  %s2 = sld [smem:[#allocation0]]
  $region18: #{tpu_custom_call.1} parent=0
    _
  %s4 = ssub.s32 1, %s2
  %s5 = scalar_select 0, %s4, %s2
  $region1: #{tpu_custom_call.1} parent=0
    #allocation2 [shape = 'u8[8192]{0}', space=vmem, size = 0x2000, scoped, tag = 'input window, operand 0, single buffered']
    #allocation3 [shape = 's32[1]{0}', space=sflag, size = 0x4, scoped, tag = 'scoped memory for tpu_custom_call.1']
    #allocation4 [shape = 's32[1]{0}', space=sflag, size = 0x4, scoped, tag = 'scoped memory for tpu_custom_call.1']
    #allocation5 [shape = 'u8[8192]{0}', space=vmem, size = 0x2000, scoped, tag = 'output window, operand 0, single buffered']
    %6 = vsyncpa [#allocation3], 0
    %7 = vsyncpa [#allocation4], 0
    // Predicated region
    $region2: #{tpu_custom_call.1} parent=1 // pred_check
      _
    $region3: #{tpu_custom_call.1} parent=1 // pred_check_branch
      %9 = sbr.rel (0) target = $region5
    $region4: #{tpu_custom_call.1} parent=1 // pred_region
      %s11 = ssub.s32 256, 256
      %12 = vsyncadd [#allocation3], %s11
      %s14 = sshll.u32 [#allocation2], 4
      %s15 = int_to_ptr.vmem [resolvable:$true] %s14
      %17 = dma.hbm_to_vmem [thread:$0]  %s0, 256, %s15, [#allocation3]
    $region5: #{tpu_custom_call.1} parent=1 // pred_fallthru
      _
    // Predicated region
    $region6: #{tpu_custom_call.1} parent=1 // pred_check
      _
    $region7: #{tpu_custom_call.1} parent=1 // pred_check_branch
      %19 = sbr.rel (0) target = $region9
    $region8: #{tpu_custom_call.1} parent=1 // pred_region
      %20 = dma.done [#allocation3], 256
    $region9: #{tpu_custom_call.1} parent=1 // pred_fallthru
      _
    %v21 = vld [vmem:[#allocation2] sm:$0xff]
    %v22 = vld [vmem:[#allocation2 + $0x8] sm:$0xff]
    %v23 = vmul.f32 %v21, 0.003921569
    %v24 = vmul.f32 %v22, 0.003921569
    %v25 = vsub.f32 %v23, 0.5
    %v26 = vsub.f32 %v24, 0.5
    %27 = vst [vmem:[#allocation5] sm:$0xff] %v25
    %28 = vst [vmem:[#allocation5 + $0x8] sm:$0xff] %v26
    // Predicated region
    $region10: #{tpu_custom_call.1} parent=1 // pred_check
      _
    $region11: #{tpu_custom_call.1} parent=1 // pred_check_branch
      %30 = sbr.rel (0) target = $region13
    $region12: #{tpu_custom_call.1} parent=1 // pred_region
      %s32 = ssub.s32 256, 256
      %33 = vsyncadd [#allocation4], %s32
      %s35 = sshll.u32 [#allocation5], 4
      %s36 = int_to_ptr.vmem [resolvable:$true] %s35
      %38 = dma.vmem_to_hbm [thread:$0]  %s36, 256, %s1, [#allocation4]
    $region13: #{tpu_custom_call.1} parent=1 // pred_fallthru
      _
    // Predicated region
    $region14: #{tpu_custom_call.1} parent=1 // pred_check
      _
    $region15: #{tpu_custom_call.1} parent=1 // pred_check_branch
      %40 = sbr.rel (0) target = $region17
    $region16: #{tpu_custom_call.1} parent=1 // pred_region
      %41 = dma.done [#allocation4], 256
    $region17: #{tpu_custom_call.1} parent=1 // pred_fallthru
      _
    %42 = vsyncpa [#allocation3], 1
    %43 = vsyncpa [#allocation4], 1

</llo_original>
